<compile_context>
chip_gen: v7x
topology: tpu7x:2x2x1
jax: 0.10.0
libtpu: 0.0.40
codegen_flags: <defaults>
</compile_context>

<pallas_src>
import functools

import jax
import jax.numpy as jnp
from jax import lax
from jax.experimental import pallas as pl
from jax.experimental.pallas import tpu as pltpu

MARGIN = 1.0   # nn.Module "parameter" (margin=1.0), set deterministically in-script
EPS = 1e-6     # torch pairwise_distance default eps (added to the difference)


def _contrastive_kernel(o1_ref, o2_ref, lbl_ref, out_ref, acc_ref, *,
                        total_rows, tile_b):
    """Lane-dense layout: o1/o2 tiles are (D, TB); label tile is (1, TB)."""
    i = pl.program_id(0)

    @pl.when(i == 0)
    def _():
        acc_ref[...] = jnp.zeros_like(acc_ref)

    # Elementwise diff + square, then a sublane reduce over the feature axis.
    diff = o1_ref[...] - o2_ref[...] + EPS                      # (D, TB)
    d2 = jnp.sum(diff * diff, axis=0, keepdims=True)            # (1, TB)
    d = jnp.sqrt(d2)                                            # EUP, (1, TB)

    lbl = lbl_ref[...]                                          # (1, TB)
    hinge = jnp.maximum(MARGIN - d, 0.0)                        # (1, TB)
    # Reuse d2 for the dissimilar term instead of recomputing d*d.
    loss = (1.0 - lbl) * d2 + lbl * (hinge * hinge)             # (1, TB)

    # Mask batch columns past the end of the array (last tile may be partial).
    col = lax.broadcasted_iota(jnp.int32, (1, tile_b), 1) + i * tile_b
    loss = jnp.where(col < total_rows, loss, 0.0)

    # Vector-domain accumulation; no per-step scalar reduce.
    acc_ref[...] += loss

    @pl.when(i == pl.num_programs(0) - 1)
    def _():
        out_ref[0, 0] = jnp.sum(acc_ref[...]) / jnp.float32(total_rows)


def _pick_tile_b(B, D, target_tile_bytes):
    """Batch (lane) tile: ~target bytes per input tile, multiple of 128."""
    tb = max(128, (target_tile_bytes // (4 * max(D, 1))) // 128 * 128)
    if tb >= B:
        return int(B)          # one full-extent block (valid for any B)
    return int(tb)


def contrastive_loss(output1, output2, label, *, target_tile_bytes=4 * 1024 * 1024):
    """output1, output2: (B, D) f32; label: (B,) f32. Returns scalar f32."""
    B, D = output1.shape

    # Lane-dense layout: batch along lanes, features along sublanes.
    o1t = jnp.asarray(output1, jnp.float32).T          # (D, B)
    o2t = jnp.asarray(output2, jnp.float32).T          # (D, B)
    lbl = jnp.asarray(label, jnp.float32).reshape(1, B)

    tile_b = _pick_tile_b(B, D, target_tile_bytes)
    grid = pl.cdiv(B, tile_b)

    kernel = functools.partial(_contrastive_kernel, total_rows=B, tile_b=tile_b)

    out = pl.pallas_call(
        kernel,
        out_shape=jax.ShapeDtypeStruct((1, 1), jnp.float32),
        grid_spec=pltpu.PrefetchScalarGridSpec(
            num_scalar_prefetch=0,
            grid=(grid,),
            in_specs=[
                pl.BlockSpec((D, tile_b), lambda i: (0, i)),
                pl.BlockSpec((D, tile_b), lambda i: (0, i)),
                pl.BlockSpec((1, tile_b), lambda i: (0, i)),
            ],
            out_specs=pl.BlockSpec((1, 1), lambda i: (0, 0),
                                   memory_space=pltpu.SMEM),
            scratch_shapes=[pltpu.VMEM((1, tile_b), jnp.float32)],
        ),
        compiler_params=pltpu.CompilerParams(
            # Sequential reduction over batch tiles (accumulator carried).
            dimension_semantics=("arbitrary",),
            # Raise the scoped VMEM limit (v5e defaults to 16 MiB) while the
            # ~16 MiB double-buffered working set stays under v7x's 64 MiB.
            vmem_limit_bytes=48 * 1024 * 1024,
        ),
    )(o1t, o2t, lbl)
    return out[0, 0]


def contrastive_loss_ref(output1, output2, label):
    diff = output1 - output2 + EPS
    d = jnp.sqrt(jnp.sum(diff * diff, axis=-1))
    loss = (1.0 - label) * d**2 + label * jnp.maximum(MARGIN - d, 0.0) ** 2
    return jnp.mean(loss)


if __name__ == "__main__":
    key = jax.random.PRNGKey(0)

    # Test 1: small demo shapes (single block covering the whole batch).
    k1, k2, k3 = jax.random.split(key, 3)
    B, D = 16, 32
    output1 = jax.random.normal(k1, (B, D), dtype=jnp.float32)
    output2 = jax.random.normal(k2, (B, D), dtype=jnp.float32)
    label = jax.random.bernoulli(k3, 0.5, (B,)).astype(jnp.float32)

    loss = jax.block_until_ready(contrastive_loss(output1, output2, label))
    ref = contrastive_loss_ref(output1, output2, label)
    assert jnp.allclose(loss, ref, rtol=1e-5, atol=1e-5), (loss, ref)

    # Test 2: batch not divisible by the tile -> exercises multi-step
    # accumulation and out-of-range-column masking (tile_b forced to 128).
    k4, k5, k6 = jax.random.split(jax.random.PRNGKey(1), 3)
    B2, D2 = 200, 32
    o1b = jax.random.normal(k4, (B2, D2), dtype=jnp.float32)
    o2b = jax.random.normal(k5, (B2, D2), dtype=jnp.float32)
    lblb = jax.random.bernoulli(k6, 0.5, (B2,)).astype(jnp.float32)

    loss2 = jax.block_until_ready(
        contrastive_loss(o1b, o2b, lblb, target_tile_bytes=4 * D2 * 128))
    ref2 = contrastive_loss_ref(o1b, o2b, lblb)
    assert jnp.allclose(loss2, ref2, rtol=1e-5, atol=1e-5), (loss2, ref2)

    print("KERNEL_OK")
</pallas_src>

<mosaic_0001>
module attributes {stable_mosaic.version = 11 : i64} {
  func.func @_contrastive_kernel(%arg0: i32, %arg1: memref<32x16xf32, #tpu.memory_space<vmem>>, %arg2: memref<32x16xf32, #tpu.memory_space<vmem>>, %arg3: memref<1x16xf32, #tpu.memory_space<vmem>>, %arg4: memref<1x1xf32, #tpu.memory_space<smem>>, %arg5: memref<1x16xf32, #tpu.memory_space<vmem>>) attributes {dimension_semantics = [#tpu.dimension_semantics<arbitrary>], iteration_bounds = array<i64: 1>, scalar_prefetch = 0 : i64, scratch_operands = 1 : i64, tpu.core_type = #tpu.core_type<tc>, window_params = [{transform_indices = @transform_0, window_bounds = array<i64: 32, 16>}, {transform_indices = @transform_1, window_bounds = array<i64: 32, 16>}, {transform_indices = @transform_2, window_bounds = array<i64: 1, 16>}, {transform_indices = @transform_3, window_bounds = array<i64: 1, 1>}]} {
    %c0_i32 = arith.constant 0 : i32
    %0 = arith.cmpi eq, %arg0, %c0_i32 : i32
    %1 = arith.extui %0 : i1 to i32
    %c0_i32_0 = arith.constant 0 : i32
    %2 = arith.cmpi ne, %1, %c0_i32_0 : i32
    scf.if %2 {
      %cst_18 = arith.constant 0.000000e+00 : f32
      %37 = vector.broadcast %cst_18 : f32 to vector<1x16xf32>
      %c0_19 = arith.constant 0 : index
      %c0_20 = arith.constant 0 : index
      %38 = vector.load %arg5[%c0_19, %c0_20] : memref<1x16xf32, #tpu.memory_space<vmem>>, vector<1x16xf32>
      tpu.vector_store %arg5[%c0_19, %c0_20], %37 {strides = array<i32>} : memref<1x16xf32, #tpu.memory_space<vmem>>, vector<1x16xf32>,
    } else {
    }
    %c0 = arith.constant 0 : index
    %c0_1 = arith.constant 0 : index
    %3 = vector.load %arg1[%c0, %c0_1] : memref<32x16xf32, #tpu.memory_space<vmem>>, vector<32x16xf32>
    %c0_2 = arith.constant 0 : index
    %c0_3 = arith.constant 0 : index
    %4 = vector.load %arg2[%c0_2, %c0_3] : memref<32x16xf32, #tpu.memory_space<vmem>>, vector<32x16xf32>
    %5 = arith.subf %3, %4 : vector<32x16xf32>
    %cst = arith.constant 9.99999997E-7 : f32
    %6 = vector.broadcast %cst : f32 to vector<32x16xf32>
    %7 = arith.addf %5, %6 : vector<32x16xf32>
    %8 = arith.mulf %7, %7 : vector<32x16xf32>
    %cst_4 = arith.constant dense<0.000000e+00> : vector<16xf32>
    %9 = vector.multi_reduction <add>, %8, %cst_4 [0] : vector<32x16xf32> to vector<16xf32>
    %10 = vector.shape_cast %9 : vector<16xf32> to vector<1x16xf32>
    %11 = math.sqrt %10 : vector<1x16xf32>
    %c0_5 = arith.constant 0 : index
    %c0_6 = arith.constant 0 : index
    %12 = vector.load %arg3[%c0_5, %c0_6] : memref<1x16xf32, #tpu.memory_space<vmem>>, vector<1x16xf32>
    %cst_7 = arith.constant 1.000000e+00 : f32
    %13 = vector.broadcast %cst_7 : f32 to vector<1x16xf32>
    %14 = arith.subf %13, %11 : vector<1x16xf32>
    %cst_8 = arith.constant 0.000000e+00 : f32
    %15 = vector.broadcast %cst_8 : f32 to vector<1x16xf32>
    %16 = arith.maximumf %14, %15 : vector<1x16xf32>
    %cst_9 = arith.constant 1.000000e+00 : f32
    %17 = vector.broadcast %cst_9 : f32 to vector<1x16xf32>
    %18 = arith.subf %17, %12 : vector<1x16xf32>
    %19 = arith.mulf %18, %10 : vector<1x16xf32>
    %20 = arith.mulf %16, %16 : vector<1x16xf32>
    %21 = arith.mulf %12, %20 : vector<1x16xf32>
    %22 = arith.addf %19, %21 : vector<1x16xf32>
    %23 = tpu.iota {dimensions = array<i32: 1>} : vector<1x16xi32>
    %c16_i32 = arith.constant 16 : i32
    %24 = arith.muli %arg0, %c16_i32 : i32
    %25 = vector.broadcast %24 : i32 to vector<1x16xi32>
    %26 = arith.addi %23, %25 : vector<1x16xi32>
    %c16_i32_10 = arith.constant 16 : i32
    %27 = vector.broadcast %c16_i32_10 : i32 to vector<1x16xi32>
    %28 = arith.cmpi slt, %26, %27 : vector<1x16xi32>
    %cst_11 = arith.constant 0.000000e+00 : f32
    %29 = vector.broadcast %cst_11 : f32 to vector<1x16xf32>
    %30 = arith.select %28, %22, %29 : vector<1x16xi1>, vector<1x16xf32>
    %c0_12 = arith.constant 0 : index
    %c0_13 = arith.constant 0 : index
    %31 = vector.load %arg5[%c0_12, %c0_13] : memref<1x16xf32, #tpu.memory_space<vmem>>, vector<1x16xf32>
    %32 = arith.addf %31, %30 : vector<1x16xf32>
    %c0_14 = arith.constant 0 : index
    %c0_15 = arith.constant 0 : index
    %33 = vector.load %arg5[%c0_14, %c0_15] : memref<1x16xf32, #tpu.memory_space<vmem>>, vector<1x16xf32>
    tpu.vector_store %arg5[%c0_14, %c0_15], %32 {strides = array<i32>} : memref<1x16xf32, #tpu.memory_space<vmem>>, vector<1x16xf32>,
    %c0_i32_16 = arith.constant 0 : i32
    %34 = arith.cmpi eq, %arg0, %c0_i32_16 : i32
    %35 = arith.extui %34 : i1 to i32
    %c0_i32_17 = arith.constant 0 : i32
    %36 = arith.cmpi ne, %35, %c0_i32_17 : i32
    scf.if %36 {
      %c0_18 = arith.constant 0 : index
      %c0_19 = arith.constant 0 : index
      %37 = vector.load %arg5[%c0_18, %c0_19] : memref<1x16xf32, #tpu.memory_space<vmem>>, vector<1x16xf32>
      %38 = vector.shape_cast %37 : vector<1x16xf32> to vector<1x1x16xf32>
      %cst_20 = arith.constant dense<0.000000e+00> : vector<1xf32>
      %39 = vector.multi_reduction <add>, %38, %cst_20 [1, 2] : vector<1x1x16xf32> to vector<1xf32>
      %40 = vector.shape_cast %39 : vector<1xf32> to vector<1x1x1xf32>
      %41 = vector.extract %40[0, 0, 0] : f32 from vector<1x1x1xf32>
      %cst_21 = arith.constant 1.600000e+01 : f32
      %42 = arith.divf %41, %cst_21 : f32
      %c0_22 = arith.constant 0 : index
      %c0_23 = arith.constant 0 : index
      %43 = memref.load %arg4[%c0_22, %c0_23] : memref<1x1xf32, #tpu.memory_space<smem>>
      memref.store %42, %arg4[%c0_22, %c0_23] : memref<1x1xf32, #tpu.memory_space<smem>>
    } else {
    }
    return
  }
  func.func @transform_0(%arg0: i32) -> (i32, i32) {
    %c0_i32 = arith.constant 0 : i32
    %c0_i32_0 = arith.constant 0 : i32
    return %c0_i32, %arg0 : i32, i32
  }
  func.func @transform_1(%arg0: i32) -> (i32, i32) {
    %c0_i32 = arith.constant 0 : i32
    %c0_i32_0 = arith.constant 0 : i32
    return %c0_i32, %arg0 : i32, i32
  }
  func.func @transform_2(%arg0: i32) -> (i32, i32) {
    %c0_i32 = arith.constant 0 : i32
    %c0_i32_0 = arith.constant 0 : i32
    return %c0_i32, %arg0 : i32, i32
  }
  func.func @transform_3(%arg0: i32) -> (i32, i32) {
    %c0_i32 = arith.constant 0 : i32
    %c0_i32_0 = arith.constant 0 : i32
    %c0_i32_1 = arith.constant 0 : i32
    return %c0_i32, %c0_i32_0 : i32, i32
  }
}

</mosaic_0001>

<llo_original>
// kernel: tpu_custom_call.1
$region0: #{tpu_custom_call.1}
  #allocation0 [shape = 'u32[]', space=smem, size = 0x4, offset = 0x4, fixed_abs, tag = 'smem constant byte address 0x4 - core index']
  #allocation1 [shape = 'u32[144,128]{1,0:T(1,128)}', space=vmem, size = 0x12000, scoped, tag = 'internal scratch']
  #allocation2 [shape = 'f32[1,16]{1,0:T(1,128)}', space=vmem, size = 0x200, scoped, tag = 'scratch operand']
  %s0 = inlined_call_operand.vmem [shape: f32[32,16], index: 0, kind: input, shape index: {}]
  %s1 = inlined_call_operand.vmem [shape: f32[32,16], index: 1, kind: input, shape index: {}]
  %s2 = inlined_call_operand.vmem [shape: f32[1,16], index: 2, kind: input, shape index: {}]
  %s3 = inlined_call_operand.hbm [shape: f32[1,1], index: 3, kind: output, shape index: {}]
  %s4 = sld [smem:[#allocation0]]
  $region30: #{tpu_custom_call.1} parent=0
    _
  %s6 = ssub.s32 1, %s4
  %s7 = scalar_select 0, %s6, %s4
  $region1: #{tpu_custom_call.1} parent=0
    #allocation3 [shape = 'u8[512]{0}', space=smem, size = 0x200, scoped, tag = 'output window, operand 0, single buffered']
    #allocation4 [shape = 's32[1]{0}', space=sflag, size = 0x4, scoped, tag = 'scoped memory for tpu_custom_call.1']
    %8 = vsyncpa [#allocation4], 0
    // Predicated region
    $region2: #{tpu_custom_call.1} parent=1 // pred_check
      _
    $region3: #{tpu_custom_call.1} parent=1 // pred_check_branch
      %10 = sbr.rel (0) target = $region5
    $region4: #{tpu_custom_call.1} parent=1 // pred_region
      _
    $region5: #{tpu_custom_call.1} parent=1 // pred_fallthru
      _
    // Predicated region
    $region6: #{tpu_custom_call.1} parent=1 // pred_check
      _
    $region7: #{tpu_custom_call.1} parent=1 // pred_check_branch
      %12 = sbr.rel (0) target = $region9
    $region8: #{tpu_custom_call.1} parent=1 // pred_region
      _
    $region9: #{tpu_custom_call.1} parent=1 // pred_fallthru
      _
    // Predicated region
    $region10: #{tpu_custom_call.1} parent=1 // pred_check
      _
    $region11: #{tpu_custom_call.1} parent=1 // pred_check_branch
      %14 = sbr.rel (0) target = $region13
    $region12: #{tpu_custom_call.1} parent=1 // pred_region
      _
    $region13: #{tpu_custom_call.1} parent=1 // pred_fallthru
      _
    %p15 = scmp.eq.s32.totalorder 0, 0
    // Predicated region
    $region14: #{tpu_custom_call.1} parent=1 // pred_check
      %p16 = pneg %p15
    $region15: #{tpu_custom_call.1} parent=1 // pred_check_branch
      %18 = sbr.rel (%p16) target = $region17
    $region16: #{tpu_custom_call.1} parent=1 // pred_region
      %vm19 = vcmask 122880
      %20 = vst.msk [vmem:[#allocation2] sm:$0x1] %vm19, 0.0
    $region17: #{tpu_custom_call.1} parent=1 // pred_fallthru
      _
    %v21 = vld [vmem:[%s0] sm:$0xff]
    %v22 = vld [vmem:[%s0 + $0x8] sm:$0xff]
    %v23 = vld [vmem:[%s0 + $0x10] sm:$0xff]
    %v24 = vld [vmem:[%s0 + $0x18] sm:$0xff]
    %v25 = vld [vmem:[%s1] sm:$0xff]
    %v26 = vld [vmem:[%s1 + $0x8] sm:$0xff]
    %v27 = vld [vmem:[%s1 + $0x10] sm:$0xff]
    %v28 = vld [vmem:[%s1 + $0x18] sm:$0xff]
    %v29 = vsub.f32 %v21, %v25
    %v30 = vsub.f32 %v22, %v26
    %v31 = vsub.f32 %v23, %v27
    %v32 = vsub.f32 %v24, %v28
    %v33 = vadd.f32 %v29, 1e-06
    %v34 = vadd.f32 %v30, 1e-06
    %v35 = vadd.f32 %v31, 1e-06
    %v36 = vadd.f32 %v32, 1e-06
    %v37 = vmul.f32 %v33, %v33
    %v38 = vmul.f32 %v34, %v34
    %v39 = vmul.f32 %v35, %v35
    %v40 = vmul.f32 %v36, %v36
    %vm41 = vcmask 130048
    %v42 = vsel %vm41, %v37, 0.0
    %v43 = vsel %vm41, %v38, 0.0
    %v44 = vadd.f32 %v42, %v43
    %v45 = vsel %vm41, %v39, 0.0
    %v46 = vadd.f32 %v44, %v45
    %v47 = vsel %vm41, %v40, 0.0
    %v48 = vadd.f32 %v46, %v47
    %v49 = vrot.slane %v48, 4
    %v50 = vadd.f32 %v48, %v49
    %v51 = vrot.slane %v50, 2
    %v52 = vadd.f32 %v50, %v51
    %v53 = vrot.slane %v52, 1
    %v54 = vadd.f32 %v52, %v53
    %v55 = vrsqrt.pop %v54
    %v56 = vmul.f32 %v54, %v55
    %vm57 = vcmp.eq.f32.partialorder %v54, inf
    %v58 = vsel %vm57, %v54, %v56
    %vm59 = vcmp.eq.f32.partialorder %v54, 0.0
    %v60 = vand.u32 %v54, 2147483648
    %v61 = vsel %vm59, %v60, %v58
    %v62 = vld [vmem:[%s2] sm:$0x1]
    %v63 = vsub.f32 1.0, %v61
    %v64 = vmax.f32 %v63, 0.0
    %v65 = vsub.f32 1.0, %v62
    %v66 = vmul.f32 %v65, %v54
    %v67 = vmul.f32 %v64, %v64
    %v68 = vmul.f32 %v62, %v67
    %v69 = vadd.f32 %v66, %v68
    %v70 = vlaneseq
    %v71 = vand.u32 %v70, 127
    %s72 = smul.u32 0, 16
    %v73 = vstv %s72
    %v74 = vadd.s32 %v71, %v73
    %vm75 = vcmp.lt.s32.totalorder %v74, 16
    %v76 = vsel %vm75, %v69, 0.0
    %v77 = vld [vmem:[#allocation2] sm:$0x1]
    %v78 = vadd.f32 %v77, %v76
    %vm79 = vcmask 122880
    %80 = vst.msk [vmem:[#allocation2] sm:$0x1] %vm79, %v78
    // Predicated region
    $region18: #{tpu_custom_call.1} parent=1 // pred_check
      %p81 = pneg %p15
    $region19: #{tpu_custom_call.1} parent=1 // pred_check_branch
      %83 = sbr.rel (%p81) target = $region21
    $region20: #{tpu_custom_call.1} parent=1 // pred_region
      %v84 = vld [vmem:[#allocation2] sm:$0x1]
      %v85 = vsel %vm79, %v84, 0.0
      %86 = vadd.xlane.f32.xlu0 %v85
      %v87 = vpop.xlane.xlu0 %86
      %v88 = vrot.slane %v87, 4
      %v89 = vadd.f32 %v87, %v88
      %v90 = vrot.slane %v89, 2
      %v91 = vadd.f32 %v89, %v90
      %v92 = vrot.slane %v91, 1
      %v93 = vadd.f32 %v91, %v92
      %s94 = vtos %v93
      %v95 = vrcp.pop 16.0
      %s96 = vtos %v95
      %s97 = smul.f32 %s94, %s96
      %s98 = scalar_lea.smem [#allocation3], 0
      %99 = sst [smem:[%s98]] %s97
    $region21: #{tpu_custom_call.1} parent=1 // pred_fallthru
      _
    // Predicated region
    $region22: #{tpu_custom_call.1} parent=1 // pred_check
      _
    $region23: #{tpu_custom_call.1} parent=1 // pred_check_branch
      %101 = sbr.rel (0) target = $region25
    $region24: #{tpu_custom_call.1} parent=1 // pred_region
      %s103 = ssub.s32 16, 16
      %104 = vsyncadd [#allocation4], %s103
      %107 = dma.smem_to_hbm [#allocation3], 16, %s3, [#allocation4]
    $region25: #{tpu_custom_call.1} parent=1 // pred_fallthru
      _
    // Predicated region
    $region26: #{tpu_custom_call.1} parent=1 // pred_check
      _
    $region27: #{tpu_custom_call.1} parent=1 // pred_check_branch
      %109 = sbr.rel (0) target = $region29
    $region28: #{tpu_custom_call.1} parent=1 // pred_region
      %110 = dma.done [#allocation4], 16
    $region29: #{tpu_custom_call.1} parent=1 // pred_fallthru
      _
    %111 = sfence
    %112 = vsyncpa [#allocation4], 1

</llo_original>
